<compile_context>
chip_gen: v5e
topology: v5e:2x2
jax: 0.10.0
libtpu: 0.0.40
codegen_flags: <defaults>
</compile_context>

<pallas_src>
import functools

import jax
import jax.numpy as jnp
from jax.experimental import pallas as pl
from jax.experimental.pallas import tpu as pltpu


H1 = 128       # feature layer 1 width (Linear(input_dim, 128))
H2 = 64        # feature layer 2 width (Linear(128, 64)) -- logical
H2_PAD = 128   # lane-dense padded width of h2 / head contraction dim
LANES = 128


def _round_up(x, m):
    return (x + m - 1) // m * m


def _cdiv(a, b):
    return (a + b - 1) // b


def rainbow_dqn_kernel(x_ref, w1_ref, b1_ref, w2_ref, b2_ref, wh_ref, bh_ref, out_ref):
    """One batch tile.

    x_ref : (tile_b, in_dim)  f32  (cast to bf16 here, on the otherwise-idle VPU)
    w*_ref: bf16 matmul operands (VMEM-resident across the whole grid)
    b*_ref: f32 bias rows
    out   : (tile_b, head_n)  bf16, columns [adv(0:A) | val(A) | zero pad]
    Matmuls run on the MXU with f32 accumulation; bias add / ReLU stay in f32.
    """
    x = x_ref[...].astype(jnp.bfloat16)                       # in-kernel cast (perf review)

    h1 = jnp.dot(x, w1_ref[...], preferred_element_type=jnp.float32)
    h1 = jnp.maximum(h1 + b1_ref[...], 0.0)

    h2 = jnp.dot(h1.astype(jnp.bfloat16), w2_ref[...], preferred_element_type=jnp.float32)
    h2 = jnp.maximum(h2 + b2_ref[...], 0.0)

    heads = jnp.dot(h2.astype(jnp.bfloat16), wh_ref[...], preferred_element_type=jnp.float32)
    out_ref[...] = (heads + bh_ref[...]).astype(jnp.bfloat16)  # bf16 store (perf review)


def prepare_params(params):
    """One-time parameter setup (outside the per-step hot path).

    * Compose NoisyLinear training-mode effective weights (mu + sigma * eps).
    * Transpose (out, in) -> (in, out) once.
    * Fuse advantage (64 x A) and value (64 x 1) heads into one lane-dense matrix,
      zero-padded to (128, head_n) with head_n a multiple of 128.
    * Zero-pad the h2 width 64 -> 128.
    * Cast matmul operands to bf16; biases stay f32.
    """
    (w1, b1, w2, b2,
     aw_mu, aw_sig, aw_eps, ab_mu, ab_sig, ab_eps,
     vw_mu, vw_sig, vw_eps, vb_mu, vb_sig, vb_eps) = params

    wa = aw_mu + aw_sig * aw_eps          # (A, 64)
    ba = ab_mu + ab_sig * ab_eps          # (A,)
    wv = vw_mu + vw_sig * vw_eps          # (1, 64)
    bv = vb_mu + vb_sig * vb_eps          # (1,)

    out_dim = wa.shape[0]
    head_n = _round_up(out_dim + 1, LANES)

    w1k = w1.T.astype(jnp.bfloat16)                                   # (in_dim, 128)
    b1k = b1.reshape(1, H1).astype(jnp.float32)

    w2k = jnp.zeros((H1, H2_PAD), jnp.float32).at[:, :H2].set(w2.T)
    w2k = w2k.astype(jnp.bfloat16)                                    # (128, 128)
    b2k = jnp.zeros((1, H2_PAD), jnp.float32).at[:, :H2].set(b2.reshape(1, H2))

    whk = jnp.zeros((H2_PAD, head_n), jnp.float32)
    whk = whk.at[:H2, :out_dim].set(wa.T)
    whk = whk.at[:H2, out_dim:out_dim + 1].set(wv.T)
    whk = whk.astype(jnp.bfloat16)                                    # (128, head_n)
    bhk = jnp.zeros((1, head_n), jnp.float32)
    bhk = bhk.at[0, :out_dim].set(ba)
    bhk = bhk.at[0, out_dim].set(bv[0])

    return (w1k, b1k, w2k, b2k, whk, bhk), out_dim


@functools.partial(jax.jit, static_argnames=("output_dim", "tile_b"))
def rainbow_dqn_forward(x, kernel_params, output_dim, tile_b=2048):
    """x: (B, C, H, W) float32. Returns (B, output_dim) float32."""
    w1k, b1k, w2k, b2k, whk, bhk = kernel_params
    B = x.shape[0]
    in_dim = w1k.shape[0]
    head_n = whk.shape[1]

    x_flat = x.reshape(B, -1)             # nn.Flatten(); stays f32 -> cast happens in-kernel

    # Balanced batch tiling: pick num_tiles, then split B evenly (padding < 8 rows/tile).
    num_tiles = _cdiv(B, tile_b)
    # v7x has 2 TensorCores sharded over the "parallel" axis: prefer >=2 grid steps when
    # each tile keeps >=256 rows (per-step overhead ~0.35 us stays negligible).
    if num_tiles == 1 and B >= 512:
        num_tiles = 2
    tb = _round_up(_cdiv(B, num_tiles), 8)
    b_pad = _round_up(B, tb)
    if b_pad != B:
        x_flat = jnp.pad(x_flat, ((0, b_pad - B), (0, 0)))
    grid = (b_pad // tb,)

    flops = 2 * b_pad * (in_dim * H1 + H1 * H2_PAD + H2_PAD * head_n)
    bytes_accessed = (x_flat.size * 4                                  # f32 x read
                      + (w1k.size + w2k.size + whk.size) * 2           # bf16 weights
                      + (b1k.size + b2k.size + bhk.size) * 4           # f32 biases
                      + b_pad * head_n * 2)                            # bf16 output write

    # VMEM budget: double-buffered f32 x tile + bf16 out tile, resident weights,
    # plus headroom for f32/bf16 intermediates. Capped at 64 MiB (v7x physical per-TC).
    weight_bytes = 2 * ((w1k.size + w2k.size + whk.size) * 2
                        + (b1k.size + b2k.size + bhk.size) * 4)
    vmem_needed = (2 * tb * in_dim * 4
                   + 2 * tb * head_n * 2
                   + weight_bytes
                   + 6 * tb * LANES * 4)
    vmem_limit = int(min(max(vmem_needed + (4 << 20), 32 << 20), 64 << 20))

    const = lambda i: (0, 0)
    padded = pl.pallas_call(
        rainbow_dqn_kernel,
        out_shape=jax.ShapeDtypeStruct((b_pad, head_n), jnp.bfloat16),
        grid_spec=pltpu.PrefetchScalarGridSpec(
            num_scalar_prefetch=0,
            grid=grid,
            in_specs=[
                pl.BlockSpec((tb, in_dim), lambda i: (i, 0)),   # x: tiled over batch (f32)
                pl.BlockSpec((in_dim, H1), const),              # weights/biases: resident
                pl.BlockSpec((1, H1), const),
                pl.BlockSpec((H1, H2_PAD), const),
                pl.BlockSpec((1, H2_PAD), const),
                pl.BlockSpec((H2_PAD, head_n), const),
                pl.BlockSpec((1, head_n), const),
            ],
            out_specs=pl.BlockSpec((tb, head_n), lambda i: (i, 0)),
        ),
        compiler_params=pltpu.CompilerParams(
            dimension_semantics=("parallel",),
            vmem_limit_bytes=vmem_limit,
        ),
        cost_estimate=pl.CostEstimate(
            flops=flops, transcendentals=0, bytes_accessed=bytes_accessed),
    )(x_flat, w1k, b1k, w2k, b2k, whk, bhk)

    # Drop batch padding BEFORE the mean (padded rows carry ReLU(b1)-propagated garbage).
    heads = padded[:B]
    adv = heads[:, :output_dim].astype(jnp.float32)
    val = heads[:, output_dim:output_dim + 1].astype(jnp.float32)
    # Original rainbow_dqn.py dueling combine uses `advantage.mean()` (no dim) -> scalar
    # over all B*A elements; done here on the tiny (B, A) output so batch tiles stay
    # fully independent / parallel inside the kernel.
    return val + (adv - jnp.mean(adv))


def init_params(key, input_dim, output_dim, std_init=0.5):
    """Deterministic parameter construction mirroring the module's __init__ shapes.

    NoisyLinear.reset_noise() in the spec draws iid normal epsilon (not factorized),
    which is exactly what is done here.
    """
    ks = jax.random.split(key, 12)
    f32 = jnp.float32

    def uni(k, shape, bound):
        return jax.random.uniform(k, shape, f32, -bound, bound)

    # feature_layer: Linear(input_dim, 128), Linear(128, 64)
    b1_bound = 1.0 / jnp.sqrt(float(input_dim))
    w1 = uni(ks[0], (H1, input_dim), b1_bound)
    b1 = uni(ks[1], (H1,), b1_bound)
    b2_bound = 1.0 / jnp.sqrt(float(H1))
    w2 = uni(ks[2], (H2, H1), b2_bound)
    b2 = uni(ks[3], (H2,), b2_bound)

    # NoisyLinear(64, output_dim)
    nb = 1.0 / jnp.sqrt(float(H2))
    adv_w_mu = uni(ks[4], (output_dim, H2), nb)
    adv_b_mu = uni(ks[5], (output_dim,), nb)
    adv_w_sig = jnp.full((output_dim, H2), std_init / jnp.sqrt(float(H2)), f32)
    adv_b_sig = jnp.full((output_dim,), std_init / jnp.sqrt(float(output_dim)), f32)
    adv_w_eps = jax.random.normal(ks[6], (output_dim, H2), f32)
    adv_b_eps = jax.random.normal(ks[7], (output_dim,), f32)

    # NoisyLinear(64, 1)
    val_w_mu = uni(ks[8], (1, H2), nb)
    val_b_mu = uni(ks[9], (1,), nb)
    val_w_sig = jnp.full((1, H2), std_init / jnp.sqrt(float(H2)), f32)
    val_b_sig = jnp.full((1,), std_init / jnp.sqrt(1.0), f32)
    val_w_eps = jax.random.normal(ks[10], (1, H2), f32)
    val_b_eps = jax.random.normal(ks[11], (1,), f32)

    return (w1, b1, w2, b2,
            adv_w_mu, adv_w_sig, adv_w_eps, adv_b_mu, adv_b_sig, adv_b_eps,
            val_w_mu, val_w_sig, val_w_eps, val_b_mu, val_b_sig, val_b_eps)


def reference_forward(x, params):
    """Pure-JAX reference mirroring the PyTorch module, using the same bf16 matmul
    operand precision and bf16 head output as the kernel (f32 accumulation) so the
    comparison is tight."""
    B = x.shape[0]
    xf = x.reshape(B, -1)
    (w1, b1, w2, b2,
     aw_mu, aw_sig, aw_eps, ab_mu, ab_sig, ab_eps,
     vw_mu, vw_sig, vw_eps, vb_mu, vb_sig, vb_eps) = params

    def dot(a, w):
        return jnp.dot(a.astype(jnp.bfloat16), w.T.astype(jnp.bfloat16),
                       preferred_element_type=jnp.float32)

    h1 = jnp.maximum(dot(xf, w1) + b1, 0.0)
    h2 = jnp.maximum(dot(h1, w2) + b2, 0.0)
    wa = aw_mu + aw_sig * aw_eps
    ba = ab_mu + ab_sig * ab_eps
    wv = vw_mu + vw_sig * vw_eps
    bv = vb_mu + vb_sig * vb_eps
    adv = (dot(h2, wa) + ba).astype(jnp.bfloat16).astype(jnp.float32)
    val = (dot(h2, wv) + bv).astype(jnp.bfloat16).astype(jnp.float32)
    return val + (adv - jnp.mean(adv))


if __name__ == "__main__":
    key = jax.random.PRNGKey(0)
    kx, kp = jax.random.split(key)

    # NCHW input, flattened inside the wrapper: input_dim = 4*16*16 = 1024
    B, C, H, W = 2, 4, 16, 16
    input_dim = C * H * W
    output_dim = 8  # number of actions

    x = jax.random.normal(kx, (B, C, H, W), jnp.float32)
    params = init_params(kp, input_dim, output_dim)

    kparams, out_dim = prepare_params(params)          # one-time setup (not per call)
    out = rainbow_dqn_forward(x, kparams, output_dim=out_dim)
    out = jax.block_until_ready(out)

    ref = reference_forward(x, params)
    assert out.shape == (B, output_dim)
    assert jnp.allclose(out, ref, atol=2e-2, rtol=2e-2), "mismatch vs pure-JAX reference"

    print("KERNEL_OK")
</pallas_src>

<mosaic_0001>
module attributes {stable_mosaic.version = 11 : i64} {
  func.func @rainbow_dqn_kernel(%arg0: i32, %arg1: memref<8x1024xf32, #tpu.memory_space<vmem>>, %arg2: memref<1024x128xbf16, #tpu.memory_space<vmem>>, %arg3: memref<1x128xf32, #tpu.memory_space<vmem>>, %arg4: memref<128x128xbf16, #tpu.memory_space<vmem>>, %arg5: memref<1x128xf32, #tpu.memory_space<vmem>>, %arg6: memref<128x128xbf16, #tpu.memory_space<vmem>>, %arg7: memref<1x128xf32, #tpu.memory_space<vmem>>, %arg8: memref<8x128xbf16, #tpu.memory_space<vmem>>) attributes {dimension_semantics = [#tpu.dimension_semantics<parallel>], iteration_bounds = array<i64: 1>, scalar_prefetch = 0 : i64, scratch_operands = 0 : i64, tpu.core_type = #tpu.core_type<tc>, window_params = [{transform_indices = @transform_0, window_bounds = array<i64: 8, 1024>}, {pipeline_mode = #tpu.pipeline_mode<synchronous>, transform_indices = @transform_1, window_bounds = array<i64: 1024, 128>}, {pipeline_mode = #tpu.pipeline_mode<synchronous>, transform_indices = @transform_2, window_bounds = array<i64: 1, 128>}, {pipeline_mode = #tpu.pipeline_mode<synchronous>, transform_indices = @transform_3, window_bounds = array<i64: 128, 128>}, {pipeline_mode = #tpu.pipeline_mode<synchronous>, transform_indices = @transform_4, window_bounds = array<i64: 1, 128>}, {pipeline_mode = #tpu.pipeline_mode<synchronous>, transform_indices = @transform_5, window_bounds = array<i64: 128, 128>}, {pipeline_mode = #tpu.pipeline_mode<synchronous>, transform_indices = @transform_6, window_bounds = array<i64: 1, 128>}, {transform_indices = @transform_7, window_bounds = array<i64: 8, 128>}]} {
    %c0 = arith.constant 0 : index
    %c0_0 = arith.constant 0 : index
    %0 = vector.load %arg1[%c0, %c0_0] : memref<8x1024xf32, #tpu.memory_space<vmem>>, vector<8x1024xf32>
    %1 = arith.truncf %0 : vector<8x1024xf32> to vector<8x1024xbf16>
    %c0_1 = arith.constant 0 : index
    %c0_2 = arith.constant 0 : index
    %2 = vector.load %arg2[%c0_1, %c0_2] : memref<1024x128xbf16, #tpu.memory_space<vmem>>, vector<1024x128xbf16>
    %cst = arith.constant dense<0.000000e+00> : vector<8x128xf32>
    %3 = tpu.matmul %1, %2, %cst {dimension_numbers = #tpu.dot_dimension_numbers<[1], [0], [0], [1], [0, 0, 1, 1], [], []>} : vector<8x1024xbf16>, vector<1024x128xbf16>, vector<8x128xf32> -> vector<8x128xf32>
    %c0_3 = arith.constant 0 : index
    %c0_4 = arith.constant 0 : index
    %4 = vector.load %arg3[%c0_3, %c0_4] : memref<1x128xf32, #tpu.memory_space<vmem>>, vector<1x128xf32>
    %5 = vector.broadcast %4 : vector<1x128xf32> to vector<8x128xf32>
    %6 = arith.addf %3, %5 : vector<8x128xf32>
    %cst_5 = arith.constant 0.000000e+00 : f32
    %7 = vector.broadcast %cst_5 : f32 to vector<8x128xf32>
    %8 = arith.maximumf %6, %7 : vector<8x128xf32>
    %9 = arith.truncf %8 : vector<8x128xf32> to vector<8x128xbf16>
    %c0_6 = arith.constant 0 : index
    %c0_7 = arith.constant 0 : index
    %10 = vector.load %arg4[%c0_6, %c0_7] : memref<128x128xbf16, #tpu.memory_space<vmem>>, vector<128x128xbf16>
    %cst_8 = arith.constant dense<0.000000e+00> : vector<8x128xf32>
    %11 = tpu.matmul %9, %10, %cst_8 {dimension_numbers = #tpu.dot_dimension_numbers<[1], [0], [0], [1], [0, 0, 1, 1], [], []>} : vector<8x128xbf16>, vector<128x128xbf16>, vector<8x128xf32> -> vector<8x128xf32>
    %c0_9 = arith.constant 0 : index
    %c0_10 = arith.constant 0 : index
    %12 = vector.load %arg5[%c0_9, %c0_10] : memref<1x128xf32, #tpu.memory_space<vmem>>, vector<1x128xf32>
    %13 = vector.broadcast %12 : vector<1x128xf32> to vector<8x128xf32>
    %14 = arith.addf %11, %13 : vector<8x128xf32>
    %cst_11 = arith.constant 0.000000e+00 : f32
    %15 = vector.broadcast %cst_11 : f32 to vector<8x128xf32>
    %16 = arith.maximumf %14, %15 : vector<8x128xf32>
    %17 = arith.truncf %16 : vector<8x128xf32> to vector<8x128xbf16>
    %c0_12 = arith.constant 0 : index
    %c0_13 = arith.constant 0 : index
    %18 = vector.load %arg6[%c0_12, %c0_13] : memref<128x128xbf16, #tpu.memory_space<vmem>>, vector<128x128xbf16>
    %cst_14 = arith.constant dense<0.000000e+00> : vector<8x128xf32>
    %19 = tpu.matmul %17, %18, %cst_14 {dimension_numbers = #tpu.dot_dimension_numbers<[1], [0], [0], [1], [0, 0, 1, 1], [], []>} : vector<8x128xbf16>, vector<128x128xbf16>, vector<8x128xf32> -> vector<8x128xf32>
    %c0_15 = arith.constant 0 : index
    %c0_16 = arith.constant 0 : index
    %20 = vector.load %arg7[%c0_15, %c0_16] : memref<1x128xf32, #tpu.memory_space<vmem>>, vector<1x128xf32>
    %21 = vector.broadcast %20 : vector<1x128xf32> to vector<8x128xf32>
    %22 = arith.addf %19, %21 : vector<8x128xf32>
    %23 = arith.truncf %22 : vector<8x128xf32> to vector<8x128xbf16>
    %c0_17 = arith.constant 0 : index
    %c0_18 = arith.constant 0 : index
    %24 = vector.load %arg8[%c0_17, %c0_18] : memref<8x128xbf16, #tpu.memory_space<vmem>>, vector<8x128xbf16>
    tpu.vector_store %arg8[%c0_17, %c0_18], %23 {strides = array<i32>} : memref<8x128xbf16, #tpu.memory_space<vmem>>, vector<8x128xbf16>,
    return
  }
  func.func @transform_0(%arg0: i32) -> (i32, i32) {
    %c0_i32 = arith.constant 0 : i32
    %c0_i32_0 = arith.constant 0 : i32
    return %arg0, %c0_i32 : i32, i32
  }
  func.func @transform_1(%arg0: i32) -> (i32, i32) {
    %c0_i32 = arith.constant 0 : i32
    %c0_i32_0 = arith.constant 0 : i32
    %c0_i32_1 = arith.constant 0 : i32
    return %c0_i32, %c0_i32_0 : i32, i32
  }
  func.func @transform_2(%arg0: i32) -> (i32, i32) {
    %c0_i32 = arith.constant 0 : i32
    %c0_i32_0 = arith.constant 0 : i32
    %c0_i32_1 = arith.constant 0 : i32
    return %c0_i32, %c0_i32_0 : i32, i32
  }
  func.func @transform_3(%arg0: i32) -> (i32, i32) {
    %c0_i32 = arith.constant 0 : i32
    %c0_i32_0 = arith.constant 0 : i32
    %c0_i32_1 = arith.constant 0 : i32
    return %c0_i32, %c0_i32_0 : i32, i32
  }
  func.func @transform_4(%arg0: i32) -> (i32, i32) {
    %c0_i32 = arith.constant 0 : i32
    %c0_i32_0 = arith.constant 0 : i32
    %c0_i32_1 = arith.constant 0 : i32
    return %c0_i32, %c0_i32_0 : i32, i32
  }
  func.func @transform_5(%arg0: i32) -> (i32, i32) {
    %c0_i32 = arith.constant 0 : i32
    %c0_i32_0 = arith.constant 0 : i32
    %c0_i32_1 = arith.constant 0 : i32
    return %c0_i32, %c0_i32_0 : i32, i32
  }
  func.func @transform_6(%arg0: i32) -> (i32, i32) {
    %c0_i32 = arith.constant 0 : i32
    %c0_i32_0 = arith.constant 0 : i32
    %c0_i32_1 = arith.constant 0 : i32
    return %c0_i32, %c0_i32_0 : i32, i32
  }
  func.func @transform_7(%arg0: i32) -> (i32, i32) {
    %c0_i32 = arith.constant 0 : i32
    %c0_i32_0 = arith.constant 0 : i32
    return %arg0, %c0_i32 : i32, i32
  }
}

</mosaic_0001>

<llo_original>
// kernel: rainbow_dqn_forward.1
$region0: #{rainbow_dqn_forward.1}
  #allocation0 [shape = 'u32[]', space=smem, size = 0x4, offset = 0x4, fixed_abs, tag = 'smem constant byte address 0x4 - core index']
  #allocation1 [shape = 'u32[72,128]{1,0:T(1,128)}', space=vmem, size = 0x9000, scoped, tag = 'internal scratch']
  %s0 = inlined_call_operand.vmem [shape: f32[8,1024], index: 0, kind: input, shape index: {}]
  %s1 = inlined_call_operand.hbm [shape: bf16[1024,128], index: 1, kind: input, shape index: {}]
  %s2 = inlined_call_operand.vmem [shape: f32[1,128], index: 2, kind: input, shape index: {}]
  %s3 = inlined_call_operand.vmem [shape: bf16[128,128], index: 3, kind: input, shape index: {}]
  %s4 = inlined_call_operand.vmem [shape: f32[1,128], index: 4, kind: input, shape index: {}]
  %s5 = inlined_call_operand.vmem [shape: bf16[128,128], index: 5, kind: input, shape index: {}]
  %s6 = inlined_call_operand.vmem [shape: f32[1,128], index: 6, kind: input, shape index: {}]
  %s7 = inlined_call_operand.vmem [shape: bf16[8,128], index: 7, kind: output, shape index: {}]
  %s8 = sld [smem:[#allocation0]]
  $region42: #{rainbow_dqn_forward.1} parent=0
    _
  %s10 = ssub.s32 1, %s8
  %s11 = scalar_select 0, %s10, %s8
  $region1: #{rainbow_dqn_forward.1} parent=0
    #allocation2 [shape = 'u8[262144]{0}', space=vmem, size = 0x40000, scoped, tag = 'input window, operand 1, single buffered']
    #allocation3 [shape = 's32[1]{0}', space=sflag, size = 0x4, scoped, tag = 'scoped memory for rainbow_dqn_forward.1']
    %12 = vsyncpa [#allocation3], 0
    // Predicated region
    $region2: #{rainbow_dqn_forward.1} parent=1 // pred_check
      _
    $region3: #{rainbow_dqn_forward.1} parent=1 // pred_check_branch
      %14 = sbr.rel (0) target = $region5
    $region4: #{rainbow_dqn_forward.1} parent=1 // pred_region
      _
    $region5: #{rainbow_dqn_forward.1} parent=1 // pred_fallthru
      _
    // Predicated region
    $region6: #{rainbow_dqn_forward.1} parent=1 // pred_check
      _
    $region7: #{rainbow_dqn_forward.1} parent=1 // pred_check_branch
      %16 = sbr.rel (0) target = $region9
    $region8: #{rainbow_dqn_forward.1} parent=1 // pred_region
      %18 = vsyncadd [#allocation3], 0
      %s19 = sshll.u32 %s1, 4
      %s20 = int_to_ptr.hbm [resolvable:$true] %s19
      %s21 = sshll.u32 [#allocation2], 4
      %s22 = int_to_ptr.vmem [resolvable:$true] %s21
      %27 = dma.hbm_to_vmem [thread:$0]  %s20, 8192, %s22, [#allocation3], 64, 64, 4
    $region9: #{rainbow_dqn_forward.1} parent=1 // pred_fallthru
      _
    // Predicated region
    $region10: #{rainbow_dqn_forward.1} parent=1 // pred_check
      _
    $region11: #{rainbow_dqn_forward.1} parent=1 // pred_check_branch
      %29 = sbr.rel (0) target = $region13
    $region12: #{rainbow_dqn_forward.1} parent=1 // pred_region
      _
    $region13: #{rainbow_dqn_forward.1} parent=1 // pred_fallthru
      _
    // Predicated region
    $region14: #{rainbow_dqn_forward.1} parent=1 // pred_check
      _
    $region15: #{rainbow_dqn_forward.1} parent=1 // pred_check_branch
      %31 = sbr.rel (0) target = $region17
    $region16: #{rainbow_dqn_forward.1} parent=1 // pred_region
      _
    $region17: #{rainbow_dqn_forward.1} parent=1 // pred_fallthru
      _
    // Predicated region
    $region18: #{rainbow_dqn_forward.1} parent=1 // pred_check
      _
    $region19: #{rainbow_dqn_forward.1} parent=1 // pred_check_branch
      %33 = sbr.rel (0) target = $region21
    $region20: #{rainbow_dqn_forward.1} parent=1 // pred_region
      _
    $region21: #{rainbow_dqn_forward.1} parent=1 // pred_fallthru
      _
    // Predicated region
    $region22: #{rainbow_dqn_forward.1} parent=1 // pred_check
      _
    $region23: #{rainbow_dqn_forward.1} parent=1 // pred_check_branch
      %35 = sbr.rel (0) target = $region25
    $region24: #{rainbow_dqn_forward.1} parent=1 // pred_region
      _
    $region25: #{rainbow_dqn_forward.1} parent=1 // pred_fallthru
      _
    // Predicated region
    $region26: #{rainbow_dqn_forward.1} parent=1 // pred_check
      _
    $region27: #{rainbow_dqn_forward.1} parent=1 // pred_check_branch
      %37 = sbr.rel (0) target = $region29
    $region28: #{rainbow_dqn_forward.1} parent=1 // pred_region
      _
    $region29: #{rainbow_dqn_forward.1} parent=1 // pred_fallthru
      _
    // Predicated region
    $region30: #{rainbow_dqn_forward.1} parent=1 // pred_check
      _
    $region31: #{rainbow_dqn_forward.1} parent=1 // pred_check_branch
      %39 = sbr.rel (0) target = $region33
    $region32: #{rainbow_dqn_forward.1} parent=1 // pred_region
      %41 = dma.done [#allocation3], 8192
    $region33: #{rainbow_dqn_forward.1} parent=1 // pred_fallthru
      _
    %v42 = vld [vmem:[%s0] sm:$0xff]
    %v43 = vld [vmem:[%s0 + $0x8] sm:$0xff]
    %v44 = vld [vmem:[%s0 + $0x10] sm:$0xff]
    %v45 = vld [vmem:[%s0 + $0x18] sm:$0xff]
    %v46 = vld [vmem:[%s0 + $0x20] sm:$0xff]
    %v47 = vld [vmem:[%s0 + $0x28] sm:$0xff]
    %v48 = vld [vmem:[%s0 + $0x30] sm:$0xff]
    %v49 = vld [vmem:[%s0 + $0x38] sm:$0xff]
    %v50 = vpack.c.bf16 %v42, %v42
    %v51 = vpack.c.bf16 %v43, %v43
    %v52 = vpack.c.bf16 %v44, %v44
    %v53 = vpack.c.bf16 %v45, %v45
    %v54 = vpack.c.bf16 %v46, %v46
    %v55 = vpack.c.bf16 %v47, %v47
    %v56 = vpack.c.bf16 %v48, %v48
    %v57 = vpack.c.bf16 %v49, %v49
    %v58 = vld [vmem:[#allocation2] sm:$0xf]
    %v59 = vld [vmem:[#allocation2 + $0x4] sm:$0xf]
    %v60 = vld [vmem:[#allocation2 + $0x8] sm:$0xf]
    %v61 = vld [vmem:[#allocation2 + $0xc] sm:$0xf]
    %v62 = vld [vmem:[#allocation2 + $0x10] sm:$0xf]
    %v63 = vld [vmem:[#allocation2 + $0x14] sm:$0xf]
    %v64 = vld [vmem:[#allocation2 + $0x18] sm:$0xf]
    %v65 = vld [vmem:[#allocation2 + $0x1c] sm:$0xf]
    %v66 = vld [vmem:[#allocation2 + $0x20] sm:$0xf]
    %v67 = vld [vmem:[#allocation2 + $0x24] sm:$0xf]
    %v68 = vld [vmem:[#allocation2 + $0x28] sm:$0xf]
    %v69 = vld [vmem:[#allocation2 + $0x2c] sm:$0xf]
    %v70 = vld [vmem:[#allocation2 + $0x30] sm:$0xf]
    %v71 = vld [vmem:[#allocation2 + $0x34] sm:$0xf]
    %v72 = vld [vmem:[#allocation2 + $0x38] sm:$0xf]
    %v73 = vld [vmem:[#allocation2 + $0x3c] sm:$0xf]
    %v74 = vld [vmem:[#allocation2 + $0x40] sm:$0xf]
    %v75 = vld [vmem:[#allocation2 + $0x44] sm:$0xf]
    %v76 = vld [vmem:[#allocation2 + $0x48] sm:$0xf]
    %v77 = vld [vmem:[#allocation2 + $0x4c] sm:$0xf]
    %v78 = vld [vmem:[#allocation2 + $0x50] sm:$0xf]
    %v79 = vld [vmem:[#allocation2 + $0x54] sm:$0xf]
    %v80 = vld [vmem:[#allocation2 + $0x58] sm:$0xf]
    %v81 = vld [vmem:[#allocation2 + $0x5c] sm:$0xf]
    %v82 = vld [vmem:[#allocation2 + $0x60] sm:$0xf]
    %v83 = vld [vmem:[#allocation2 + $0x64] sm:$0xf]
    %v84 = vld [vmem:[#allocation2 + $0x68] sm:$0xf]
    %v85 = vld [vmem:[#allocation2 + $0x6c] sm:$0xf]
    %v86 = vld [vmem:[#allocation2 + $0x70] sm:$0xf]
    %v87 = vld [vmem:[#allocation2 + $0x74] sm:$0xf]
    %v88 = vld [vmem:[#allocation2 + $0x78] sm:$0xf]
    %v89 = vld [vmem:[#allocation2 + $0x7c] sm:$0xf]
    %v90 = vld [vmem:[#allocation2 + $0x80] sm:$0xf]
    %v91 = vld [vmem:[#allocation2 + $0x84] sm:$0xf]
    %v92 = vld [vmem:[#allocation2 + $0x88] sm:$0xf]
    %v93 = vld [vmem:[#allocation2 + $0x8c] sm:$0xf]
    %v94 = vld [vmem:[#allocation2 + $0x90] sm:$0xf]
    %v95 = vld [vmem:[#allocation2 + $0x94] sm:$0xf]
    %v96 = vld [vmem:[#allocation2 + $0x98] sm:$0xf]
    %v97 = vld [vmem:[#allocation2 + $0x9c] sm:$0xf]
    %v98 = vld [vmem:[#allocation2 + $0xa0] sm:$0xf]
    %v99 = vld [vmem:[#allocation2 + $0xa4] sm:$0xf]
    %v100 = vld [vmem:[#allocation2 + $0xa8] sm:$0xf]
    %v101 = vld [vmem:[#allocation2 + $0xac] sm:$0xf]
    %v102 = vld [vmem:[#allocation2 + $0xb0] sm:$0xf]
    %v103 = vld [vmem:[#allocation2 + $0xb4] sm:$0xf]
    %v104 = vld [vmem:[#allocation2 + $0xb8] sm:$0xf]
    %v105 = vld [vmem:[#allocation2 + $0xbc] sm:$0xf]
    %v106 = vld [vmem:[#allocation2 + $0xc0] sm:$0xf]
    %v107 = vld [vmem:[#allocation2 + $0xc4] sm:$0xf]
    %v108 = vld [vmem:[#allocation2 + $0xc8] sm:$0xf]
    %v109 = vld [vmem:[#allocation2 + $0xcc] sm:$0xf]
    %v110 = vld [vmem:[#allocation2 + $0xd0] sm:$0xf]
    %v111 = vld [vmem:[#allocation2 + $0xd4] sm:$0xf]
    %v112 = vld [vmem:[#allocation2 + $0xd8] sm:$0xf]
    %v113 = vld [vmem:[#allocation2 + $0xdc] sm:$0xf]
    %v114 = vld [vmem:[#allocation2 + $0xe0] sm:$0xf]
    %v115 = vld [vmem:[#allocation2 + $0xe4] sm:$0xf]
    %v116 = vld [vmem:[#allocation2 + $0xe8] sm:$0xf]
    %v117 = vld [vmem:[#allocation2 + $0xec] sm:$0xf]
    %v118 = vld [vmem:[#allocation2 + $0xf0] sm:$0xf]
    %v119 = vld [vmem:[#allocation2 + $0xf4] sm:$0xf]
    %v120 = vld [vmem:[#allocation2 + $0xf8] sm:$0xf]
    %v121 = vld [vmem:[#allocation2 + $0xfc] sm:$0xf]
    %v122 = vld [vmem:[#allocation2 + $0x100] sm:$0xf]
    %v123 = vld [vmem:[#allocation2 + $0x104] sm:$0xf]
    %v124 = vld [vmem:[#allocation2 + $0x108] sm:$0xf]
    %v125 = vld [vmem:[#allocation2 + $0x10c] sm:$0xf]
    %v126 = vld [vmem:[#allocation2 + $0x110] sm:$0xf]
    %v127 = vld [vmem:[#allocation2 + $0x114] sm:$0xf]
    %v128 = vld [vmem:[#allocation2 + $0x118] sm:$0xf]
    %v129 = vld [vmem:[#allocation2 + $0x11c] sm:$0xf]
    %v130 = vld [vmem:[#allocation2 + $0x120] sm:$0xf]
    %v131 = vld [vmem:[#allocation2 + $0x124] sm:$0xf]
    %v132 = vld [vmem:[#allocation2 + $0x128] sm:$0xf]
    %v133 = vld [vmem:[#allocation2 + $0x12c] sm:$0xf]
    %v134 = vld [vmem:[#allocation2 + $0x130] sm:$0xf]
    %v135 = vld [vmem:[#allocation2 + $0x134] sm:$0xf]
    %v136 = vld [vmem:[#allocation2 + $0x138] sm:$0xf]
    %v137 = vld [vmem:[#allocation2 + $0x13c] sm:$0xf]
    %v138 = vld [vmem:[#allocation2 + $0x140] sm:$0xf]
    %v139 = vld [vmem:[#allocation2 + $0x144] sm:$0xf]
    %v140 = vld [vmem:[#allocation2 + $0x148] sm:$0xf]
    %v141 = vld [vmem:[#allocation2 + $0x14c] sm:$0xf]
    %v142 = vld [vmem:[#allocation2 + $0x150] sm:$0xf]
    %v143 = vld [vmem:[#allocation2 + $0x154] sm:$0xf]
    %v144 = vld [vmem:[#allocation2 + $0x158] sm:$0xf]
    %v145 = vld [vmem:[#allocation2 + $0x15c] sm:$0xf]
    %v146 = vld [vmem:[#allocation2 + $0x160] sm:$0xf]
    %v147 = vld [vmem:[#allocation2 + $0x164] sm:$0xf]
    %v148 = vld [vmem:[#allocation2 + $0x168] sm:$0xf]
    %v149 = vld [vmem:[#allocation2 + $0x16c] sm:$0xf]
    %v150 = vld [vmem:[#allocation2 + $0x170] sm:$0xf]
    %v151 = vld [vmem:[#allocation2 + $0x174] sm:$0xf]
    %v152 = vld [vmem:[#allocation2 + $0x178] sm:$0xf]
    %v153 = vld [vmem:[#allocation2 + $0x17c] sm:$0xf]
    %v154 = vld [vmem:[#allocation2 + $0x180] sm:$0xf]
    %v155 = vld [vmem:[#allocation2 + $0x184] sm:$0xf]
    %v156 = vld [vmem:[#allocation2 + $0x188] sm:$0xf]
    %v157 = vld [vmem:[#allocation2 + $0x18c] sm:$0xf]
    %v158 = vld [vmem:[#allocation2 + $0x190] sm:$0xf]
    %v159 = vld [vmem:[#allocation2 + $0x194] sm:$0xf]
    %v160 = vld [vmem:[#allocation2 + $0x198] sm:$0xf]
    %v161 = vld [vmem:[#allocation2 + $0x19c] sm:$0xf]
    %v162 = vld [vmem:[#allocation2 + $0x1a0] sm:$0xf]
    %v163 = vld [vmem:[#allocation2 + $0x1a4] sm:$0xf]
    %v164 = vld [vmem:[#allocation2 + $0x1a8] sm:$0xf]
    %v165 = vld [vmem:[#allocation2 + $0x1ac] sm:$0xf]
    %v166 = vld [vmem:[#allocation2 + $0x1b0] sm:$0xf]
    %v167 = vld [vmem:[#allocation2 + $0x1b4] sm:$0xf]
    %v168 = vld [vmem:[#allocation2 + $0x1b8] sm:$0xf]
    %v169 = vld [vmem:[#allocation2 + $0x1bc] sm:$0xf]
    %v170 = vld [vmem:[#allocation2 + $0x1c0] sm:$0xf]
    %v171 = vld [vmem:[#allocation2 + $0x1c4] sm:$0xf]
    %v172 = vld [vmem:[#allocation2 + $0x1c8] sm:$0xf]
    %v173 = vld [vmem:[#allocation2 + $0x1cc] sm:$0xf]
    %v174 = vld [vmem:[#allocation2 + $0x1d0] sm:$0xf]
    %v175 = vld [vmem:[#allocation2 + $0x1d4] sm:$0xf]
    %v176 = vld [vmem:[#allocation2 + $0x1d8] sm:$0xf]
    %v177 = vld [vmem:[#allocation2 + $0x1dc] sm:$0xf]
    %v178 = vld [vmem:[#allocation2 + $0x1e0] sm:$0xf]
    %v179 = vld [vmem:[#allocation2 + $0x1e4] sm:$0xf]
    %v180 = vld [vmem:[#allocation2 + $0x1e8] sm:$0xf]
    %v181 = vld [vmem:[#allocation2 + $0x1ec] sm:$0xf]
    %v182 = vld [vmem:[#allocation2 + $0x1f0] sm:$0xf]
    %v183 = vld [vmem:[#allocation2 + $0x1f4] sm:$0xf]
    %v184 = vld [vmem:[#allocation2 + $0x1f8] sm:$0xf]
    %v185 = vld [vmem:[#allocation2 + $0x1fc] sm:$0xf]
    %v186 = vld [vmem:[%s2] sm:$0x1]
    %v188 = vperm.slane %v186, 0
    %v318 = vunpack.c.l.b16 %v58
    %v319 = vunpack.c.l.b16 %v59
    %v320 = vunpack.c.l.b16 %v60
    %v321 = vunpack.c.l.b16 %v61
    %v322 = vunpack.c.l.b16 %v62
    %v323 = vunpack.c.l.b16 %v63
    %v324 = vunpack.c.l.b16 %v64
    %v325 = vunpack.c.l.b16 %v65
    %v326 = vunpack.c.l.b16 %v66
    %v327 = vunpack.c.l.b16 %v67
    %v328 = vunpack.c.l.b16 %v68
    %v329 = vunpack.c.l.b16 %v69
    %v330 = vunpack.c.l.b16 %v70
    %v331 = vunpack.c.l.b16 %v71
    %v332 = vunpack.c.l.b16 %v72
    %v333 = vunpack.c.l.b16 %v73
    %v334 = vunpack.c.l.b16 %v74
    %v335 = vunpack.c.l.b16 %v75
    %v336 = vunpack.c.l.b16 %v76
    %v337 = vunpack.c.l.b16 %v77
    %v338 = vunpack.c.l.b16 %v78
    %v339 = vunpack.c.l.b16 %v79
    %v340 = vunpack.c.l.b16 %v80
    %v341 = vunpack.c.l.b16 %v81
    %v342 = vunpack.c.l.b16 %v82
    %v343 = vunpack.c.l.b16 %v83
    %v344 = vunpack.c.l.b16 %v84
    %v345 = vunpack.c.l.b16 %v85
    %v346 = vunpack.c.l.b16 %v86
    %v347 = vunpack.c.l.b16 %v87
    %v348 = vunpack.c.l.b16 %v88
    %v349 = vunpack.c.l.b16 %v89
    %v350 = vunpack.c.l.b16 %v90
    %v351 = vunpack.c.l.b16 %v91
    %v352 = vunpack.c.l.b16 %v92
    %v353 = vunpack.c.l.b16 %v93
    %v354 = vunpack.c.l.b16 %v94
    %v355 = vunpack.c.l.b16 %v95
    %v356 = vunpack.c.l.b16 %v96
    %v357 = vunpack.c.l.b16 %v97
    %v358 = vunpack.c.l.b16 %v98
    %v359 = vunpack.c.l.b16 %v99
    %v360 = vunpack.c.l.b16 %v100
    %v361 = vunpack.c.l.b16 %v101
    %v362 = vunpack.c.l.b16 %v102
    %v363 = vunpack.c.l.b16 %v103
    %v364 = vunpack.c.l.b16 %v104
    %v365 = vunpack.c.l.b16 %v105
    %v366 = vunpack.c.l.b16 %v106
    %v367 = vunpack.c.l.b16 %v107
    %v368 = vunpack.c.l.b16 %v108
    %v369 = vunpack.c.l.b16 %v109
    %v370 = vunpack.c.l.b16 %v110
    %v371 = vunpack.c.l.b16 %v111
    %v372 = vunpack.c.l.b16 %v112
    %v373 = vunpack.c.l.b16 %v113
    %v374 = vunpack.c.l.b16 %v114
    %v375 = vunpack.c.l.b16 %v115
    %v376 = vunpack.c.l.b16 %v116
    %v377 = vunpack.c.l.b16 %v117
    %v378 = vunpack.c.l.b16 %v118
    %v379 = vunpack.c.l.b16 %v119
    %v380 = vunpack.c.l.b16 %v120
    %v381 = vunpack.c.l.b16 %v121
    %v382 = vunpack.c.l.b16 %v122
    %v383 = vunpack.c.l.b16 %v123
    %v384 = vunpack.c.l.b16 %v124
    %v385 = vunpack.c.l.b16 %v125
    %v386 = vunpack.c.l.b16 %v126
    %v387 = vunpack.c.l.b16 %v127
    %v388 = vunpack.c.l.b16 %v128
    %v389 = vunpack.c.l.b16 %v129
    %v390 = vunpack.c.l.b16 %v130
    %v391 = vunpack.c.l.b16 %v131
    %v392 = vunpack.c.l.b16 %v132
    %v393 = vunpack.c.l.b16 %v133
    %v394 = vunpack.c.l.b16 %v134
    %v395 = vunpack.c.l.b16 %v135
    %v396 = vunpack.c.l.b16 %v136
    %v397 = vunpack.c.l.b16 %v137
    %v398 = vunpack.c.l.b16 %v138
    %v399 = vunpack.c.l.b16 %v139
    %v400 = vunpack.c.l.b16 %v140
    %v401 = vunpack.c.l.b16 %v141
    %v402 = vunpack.c.l.b16 %v142
    %v403 = vunpack.c.l.b16 %v143
    %v404 = vunpack.c.l.b16 %v144
    %v405 = vunpack.c.l.b16 %v145
    %v406 = vunpack.c.l.b16 %v146
    %v407 = vunpack.c.l.b16 %v147
    %v408 = vunpack.c.l.b16 %v148
    %v409 = vunpack.c.l.b16 %v149
    %v410 = vunpack.c.l.b16 %v150
    %v411 = vunpack.c.l.b16 %v151
    %v412 = vunpack.c.l.b16 %v152
    %v413 = vunpack.c.l.b16 %v153
    %v414 = vunpack.c.l.b16 %v154
    %v415 = vunpack.c.l.b16 %v155
    %v416 = vunpack.c.l.b16 %v156
    %v417 = vunpack.c.l.b16 %v157
    %v418 = vunpack.c.l.b16 %v158
    %v419 = vunpack.c.l.b16 %v159
    %v420 = vunpack.c.l.b16 %v160
    %v421 = vunpack.c.l.b16 %v161
    %v422 = vunpack.c.l.b16 %v162
    %v423 = vunpack.c.l.b16 %v163
    %v424 = vunpack.c.l.b16 %v164
    %v425 = vunpack.c.l.b16 %v165
    %v426 = vunpack.c.l.b16 %v166
    %v427 = vunpack.c.l.b16 %v167
    %v428 = vunpack.c.l.b16 %v168
    %v429 = vunpack.c.l.b16 %v169
    %v430 = vunpack.c.l.b16 %v170
    %v431 = vunpack.c.l.b16 %v171
    %v432 = vunpack.c.l.b16 %v172
    %v433 = vunpack.c.l.b16 %v173
    %v434 = vunpack.c.l.b16 %v174
    %v435 = vunpack.c.l.b16 %v175
    %v436 = vunpack.c.l.b16 %v176
    %v437 = vunpack.c.l.b16 %v177
    %v438 = vunpack.c.l.b16 %v178
    %v439 = vunpack.c.l.b16 %v179
    %v440 = vunpack.c.l.b16 %v180
    %v441 = vunpack.c.l.b16 %v181
    %v442 = vunpack.c.l.b16 %v182
    %v443 = vunpack.c.l.b16 %v183
    %v444 = vunpack.c.l.b16 %v184
    %v445 = vunpack.c.l.b16 %v185
    %v446 = vpack.c.b16 %v319, %v318
    %v447 = vpack.c.b16 %v321, %v320
    %v448 = vpack.c.b16 %v323, %v322
    %v449 = vpack.c.b16 %v325, %v324
    %v450 = vpack.c.b16 %v327, %v326
    %v451 = vpack.c.b16 %v329, %v328
    %v452 = vpack.c.b16 %v331, %v330
    %v453 = vpack.c.b16 %v333, %v332
    %v454 = vpack.c.b16 %v335, %v334
    %v455 = vpack.c.b16 %v337, %v336
    %v456 = vpack.c.b16 %v339, %v338
    %v457 = vpack.c.b16 %v341, %v340
    %v458 = vpack.c.b16 %v343, %v342
    %v459 = vpack.c.b16 %v345, %v344
    %v460 = vpack.c.b16 %v347, %v346
    %v461 = vpack.c.b16 %v349, %v348
    %v462 = vpack.c.b16 %v351, %v350
    %v463 = vpack.c.b16 %v353, %v352
    %v464 = vpack.c.b16 %v355, %v354
    %v465 = vpack.c.b16 %v357, %v356
    %v466 = vpack.c.b16 %v359, %v358
    %v467 = vpack.c.b16 %v361, %v360
    %v468 = vpack.c.b16 %v363, %v362
    %v469 = vpack.c.b16 %v365, %v364
    %v470 = vpack.c.b16 %v367, %v366
    %v471 = vpack.c.b16 %v369, %v368
    %v472 = vpack.c.b16 %v371, %v370
    %v473 = vpack.c.b16 %v373, %v372
    %v474 = vpack.c.b16 %v375, %v374
    %v475 = vpack.c.b16 %v377, %v376
    %v476 = vpack.c.b16 %v379, %v378
    %v477 = vpack.c.b16 %v381, %v380
    %v478 = vpack.c.b16 %v383, %v382
    %v479 = vpack.c.b16 %v385, %v384
    %v480 = vpack.c.b16 %v387, %v386
    %v481 = vpack.c.b16 %v389, %v388
    %v482 = vpack.c.b16 %v391, %v390
    %v483 = vpack.c.b16 %v393, %v392
    %v484 = vpack.c.b16 %v395, %v394
    %v485 = vpack.c.b16 %v397, %v396
    %v486 = vpack.c.b16 %v399, %v398
    %v487 = vpack.c.b16 %v401, %v400
    %v488 = vpack.c.b16 %v403, %v402
    %v489 = vpack.c.b16 %v405, %v404
    %v490 = vpack.c.b16 %v407, %v406
    %v491 = vpack.c.b16 %v409, %v408
    %v492 = vpack.c.b16 %v411, %v410
    %v493 = vpack.c.b16 %v413, %v412
    %v494 = vpack.c.b16 %v415, %v414
    %v495 = vpack.c.b16 %v417, %v416
    %v496 = vpack.c.b16 %v419, %v418
    %v497 = vpack.c.b16 %v421, %v420
    %v498 = vpack.c.b16 %v423, %v422
    %v499 = vpack.c.b16 %v425, %v424
    %v500 = vpack.c.b16 %v427, %v426
    %v501 = vpack.c.b16 %v429, %v428
    %v502 = vpack.c.b16 %v431, %v430
    %v503 = vpack.c.b16 %v433, %v432
    %v504 = vpack.c.b16 %v435, %v434
    %v505 = vpack.c.b16 %v437, %v436
    %v506 = vpack.c.b16 %v439, %v438
    %v507 = vpack.c.b16 %v441, %v440
    %v508 = vpack.c.b16 %v443, %v442
    %v509 = vpack.c.b16 %v445, %v444
    %574 = vmatpush.bf16.msra.mxu0 %v453
    %575 = vmatpush.bf16.msra.mxu0 %v452
    %576 = vmatpush.bf16.msra.mxu0 %v451
    %577 = vmatpush.bf16.msra.mxu0 %v450
    %578 = vmatpush.bf16.msra.mxu0 %v449
    %579 = vmatpush.bf16.msra.mxu0 %v448
    %580 = vmatpush.bf16.msra.mxu0 %v447
    %581 = vmatpush.bf16.msra.mxu0 %v446
    %582 = vmatmul.bf16.gmra.mxu0 %v50
    %v583 = vpop.f32.mrf.mxu0
    %v584 = vadd.f32 %v188, %v583
    %v585 = vpop.f32.mrf.mxu0
    %586 = vdwg.mxu0
    %587 = vmatpush.bf16.msra.mxu0 %v461
    %588 = vmatpush.bf16.msra.mxu0 %v460
    %589 = vmatpush.bf16.msra.mxu0 %v459
    %590 = vmatpush.bf16.msra.mxu0 %v458
    %591 = vmatpush.bf16.msra.mxu0 %v457
    %592 = vmatpush.bf16.msra.mxu0 %v456
    %593 = vmatpush.bf16.msra.mxu0 %v455
    %594 = vmatpush.bf16.msra.mxu0 %v454
    %595 = vmatmul.bf16.gmra.mxu0 %v51
    %v596 = vpop.f32.mrf.mxu0
    %v597 = vadd.f32 %v584, %v596
    %v598 = vpop.f32.mrf.mxu0
    %599 = vdwg.mxu0
    %600 = vmatpush.bf16.msra.mxu0 %v469
    %601 = vmatpush.bf16.msra.mxu0 %v468
    %602 = vmatpush.bf16.msra.mxu0 %v467
    %603 = vmatpush.bf16.msra.mxu0 %v466
    %604 = vmatpush.bf16.msra.mxu0 %v465
    %605 = vmatpush.bf16.msra.mxu0 %v464
    %606 = vmatpush.bf16.msra.mxu0 %v463
    %607 = vmatpush.bf16.msra.mxu0 %v462
    %608 = vmatmul.bf16.gmra.mxu0 %v52
    %v609 = vpop.f32.mrf.mxu0
    %v610 = vadd.f32 %v597, %v609
    %v611 = vpop.f32.mrf.mxu0
    %612 = vdwg.mxu0
    %613 = vmatpush.bf16.msra.mxu0 %v477
    %614 = vmatpush.bf16.msra.mxu0 %v476
    %615 = vmatpush.bf16.msra.mxu0 %v475
    %616 = vmatpush.bf16.msra.mxu0 %v474
    %617 = vmatpush.bf16.msra.mxu0 %v473
    %618 = vmatpush.bf16.msra.mxu0 %v472
    %619 = vmatpush.bf16.msra.mxu0 %v471
    %620 = vmatpush.bf16.msra.mxu0 %v470
    %621 = vmatmul.bf16.gmra.mxu0 %v53
    %v622 = vpop.f32.mrf.mxu0
    %v623 = vadd.f32 %v610, %v622
    %v624 = vpop.f32.mrf.mxu0
    %625 = vdwg.mxu0
    %626 = vmatpush.bf16.msra.mxu0 %v485
    %627 = vmatpush.bf16.msra.mxu0 %v484
    %628 = vmatpush.bf16.msra.mxu0 %v483
    %629 = vmatpush.bf16.msra.mxu0 %v482
    %630 = vmatpush.bf16.msra.mxu0 %v481
    %631 = vmatpush.bf16.msra.mxu0 %v480
    %632 = vmatpush.bf16.msra.mxu0 %v479
    %633 = vmatpush.bf16.msra.mxu0 %v478
    %634 = vmatmul.bf16.gmra.mxu0 %v54
    %v635 = vpop.f32.mrf.mxu0
    %v636 = vadd.f32 %v623, %v635
    %v637 = vpop.f32.mrf.mxu0
    %638 = vdwg.mxu0
    %639 = vmatpush.bf16.msra.mxu0 %v493
    %640 = vmatpush.bf16.msra.mxu0 %v492
    %641 = vmatpush.bf16.msra.mxu0 %v491
    %642 = vmatpush.bf16.msra.mxu0 %v490
    %643 = vmatpush.bf16.msra.mxu0 %v489
    %644 = vmatpush.bf16.msra.mxu0 %v488
    %645 = vmatpush.bf16.msra.mxu0 %v487
    %646 = vmatpush.bf16.msra.mxu0 %v486
    %647 = vmatmul.bf16.gmra.mxu0 %v55
    %v648 = vpop.f32.mrf.mxu0
    %v649 = vadd.f32 %v636, %v648
    %v650 = vpop.f32.mrf.mxu0
    %651 = vdwg.mxu0
    %652 = vmatpush.bf16.msra.mxu0 %v501
    %653 = vmatpush.bf16.msra.mxu0 %v500
    %654 = vmatpush.bf16.msra.mxu0 %v499
    %655 = vmatpush.bf16.msra.mxu0 %v498
    %656 = vmatpush.bf16.msra.mxu0 %v497
    %657 = vmatpush.bf16.msra.mxu0 %v496
    %658 = vmatpush.bf16.msra.mxu0 %v495
    %659 = vmatpush.bf16.msra.mxu0 %v494
    %660 = vmatmul.bf16.gmra.mxu0 %v56
    %v661 = vpop.f32.mrf.mxu0
    %v662 = vadd.f32 %v649, %v661
    %v663 = vpop.f32.mrf.mxu0
    %664 = vdwg.mxu0
    %665 = vmatpush.bf16.msra.mxu0 %v509
    %666 = vmatpush.bf16.msra.mxu0 %v508
    %667 = vmatpush.bf16.msra.mxu0 %v507
    %668 = vmatpush.bf16.msra.mxu0 %v506
    %669 = vmatpush.bf16.msra.mxu0 %v505
    %670 = vmatpush.bf16.msra.mxu0 %v504
    %671 = vmatpush.bf16.msra.mxu0 %v503
    %672 = vmatpush.bf16.msra.mxu0 %v502
    %673 = vmatmul.bf16.gmra.mxu0 %v57
    %v674 = vpop.f32.mrf.mxu0
    %v675 = vadd.f32 %v662, %v674
    %v676 = vpop.f32.mrf.mxu0
    %677 = vdwg.mxu0
    %v678 = vmax.f32 %v675, 0.0
    %v679 = vpack.c.bf16 %v678, %v678
    %v680 = vld [vmem:[%s3] sm:$0xf]
    %v681 = vld [vmem:[%s3 + $0x4] sm:$0xf]
    %v682 = vld [vmem:[%s3 + $0x8] sm:$0xf]
    %v683 = vld [vmem:[%s3 + $0xc] sm:$0xf]
    %v684 = vld [vmem:[%s3 + $0x10] sm:$0xf]
    %v685 = vld [vmem:[%s3 + $0x14] sm:$0xf]
    %v686 = vld [vmem:[%s3 + $0x18] sm:$0xf]
    %v687 = vld [vmem:[%s3 + $0x1c] sm:$0xf]
    %v688 = vld [vmem:[%s3 + $0x20] sm:$0xf]
    %v689 = vld [vmem:[%s3 + $0x24] sm:$0xf]
    %v690 = vld [vmem:[%s3 + $0x28] sm:$0xf]
    %v691 = vld [vmem:[%s3 + $0x2c] sm:$0xf]
    %v692 = vld [vmem:[%s3 + $0x30] sm:$0xf]
    %v693 = vld [vmem:[%s3 + $0x34] sm:$0xf]
    %v694 = vld [vmem:[%s3 + $0x38] sm:$0xf]
    %v695 = vld [vmem:[%s3 + $0x3c] sm:$0xf]
    %v696 = vld [vmem:[%s4] sm:$0x1]
    %v698 = vperm.slane %v696, 0
    %v716 = vunpack.c.l.b16 %v680
    %v717 = vunpack.c.l.b16 %v681
    %v718 = vunpack.c.l.b16 %v682
    %v719 = vunpack.c.l.b16 %v683
    %v720 = vunpack.c.l.b16 %v684
    %v721 = vunpack.c.l.b16 %v685
    %v722 = vunpack.c.l.b16 %v686
    %v723 = vunpack.c.l.b16 %v687
    %v724 = vunpack.c.l.b16 %v688
    %v725 = vunpack.c.l.b16 %v689
    %v726 = vunpack.c.l.b16 %v690
    %v727 = vunpack.c.l.b16 %v691
    %v728 = vunpack.c.l.b16 %v692
    %v729 = vunpack.c.l.b16 %v693
    %v730 = vunpack.c.l.b16 %v694
    %v731 = vunpack.c.l.b16 %v695
    %v732 = vpack.c.b16 %v717, %v716
    %v733 = vpack.c.b16 %v719, %v718
    %v734 = vpack.c.b16 %v721, %v720
    %v735 = vpack.c.b16 %v723, %v722
    %v736 = vpack.c.b16 %v725, %v724
    %v737 = vpack.c.b16 %v727, %v726
    %v738 = vpack.c.b16 %v729, %v728
    %v739 = vpack.c.b16 %v731, %v730
    %748 = vmatpush.bf16.msra.mxu0 %v739
    %749 = vmatpush.bf16.msra.mxu0 %v738
    %750 = vmatpush.bf16.msra.mxu0 %v737
    %751 = vmatpush.bf16.msra.mxu0 %v736
    %752 = vmatpush.bf16.msra.mxu0 %v735
    %753 = vmatpush.bf16.msra.mxu0 %v734
    %754 = vmatpush.bf16.msra.mxu0 %v733
    %755 = vmatpush.bf16.msra.mxu0 %v732
    %756 = vmatmul.bf16.gmra.mxu0 %v679
    %v757 = vpop.f32.mrf.mxu0
    %v758 = vadd.f32 %v698, %v757
    %v759 = vpop.f32.mrf.mxu0
    %760 = vdwg.mxu0
    %v761 = vmax.f32 %v758, 0.0
    %v762 = vpack.c.bf16 %v761, %v761
    %v763 = vld [vmem:[%s5] sm:$0xf]
    %v764 = vld [vmem:[%s5 + $0x4] sm:$0xf]
    %v765 = vld [vmem:[%s5 + $0x8] sm:$0xf]
    %v766 = vld [vmem:[%s5 + $0xc] sm:$0xf]
    %v767 = vld [vmem:[%s5 + $0x10] sm:$0xf]
    %v768 = vld [vmem:[%s5 + $0x14] sm:$0xf]
    %v769 = vld [vmem:[%s5 + $0x18] sm:$0xf]
    %v770 = vld [vmem:[%s5 + $0x1c] sm:$0xf]
    %v771 = vld [vmem:[%s5 + $0x20] sm:$0xf]
    %v772 = vld [vmem:[%s5 + $0x24] sm:$0xf]
    %v773 = vld [vmem:[%s5 + $0x28] sm:$0xf]
    %v774 = vld [vmem:[%s5 + $0x2c] sm:$0xf]
    %v775 = vld [vmem:[%s5 + $0x30] sm:$0xf]
    %v776 = vld [vmem:[%s5 + $0x34] sm:$0xf]
    %v777 = vld [vmem:[%s5 + $0x38] sm:$0xf]
    %v778 = vld [vmem:[%s5 + $0x3c] sm:$0xf]
    %v779 = vld [vmem:[%s6] sm:$0x1]
    %v781 = vperm.slane %v779, 0
    %v799 = vunpack.c.l.b16 %v763
    %v800 = vunpack.c.l.b16 %v764
    %v801 = vunpack.c.l.b16 %v765
    %v802 = vunpack.c.l.b16 %v766
    %v803 = vunpack.c.l.b16 %v767
    %v804 = vunpack.c.l.b16 %v768
    %v805 = vunpack.c.l.b16 %v769
    %v806 = vunpack.c.l.b16 %v770
    %v807 = vunpack.c.l.b16 %v771
    %v808 = vunpack.c.l.b16 %v772
    %v809 = vunpack.c.l.b16 %v773
    %v810 = vunpack.c.l.b16 %v774
    %v811 = vunpack.c.l.b16 %v775
    %v812 = vunpack.c.l.b16 %v776
    %v813 = vunpack.c.l.b16 %v777
    %v814 = vunpack.c.l.b16 %v778
    %v815 = vpack.c.b16 %v800, %v799
    %v816 = vpack.c.b16 %v802, %v801
    %v817 = vpack.c.b16 %v804, %v803
    %v818 = vpack.c.b16 %v806, %v805
    %v819 = vpack.c.b16 %v808, %v807
    %v820 = vpack.c.b16 %v810, %v809
    %v821 = vpack.c.b16 %v812, %v811
    %v822 = vpack.c.b16 %v814, %v813
    %831 = vmatpush.bf16.msra.mxu0 %v822
    %832 = vmatpush.bf16.msra.mxu0 %v821
    %833 = vmatpush.bf16.msra.mxu0 %v820
    %834 = vmatpush.bf16.msra.mxu0 %v819
    %835 = vmatpush.bf16.msra.mxu0 %v818
    %836 = vmatpush.bf16.msra.mxu0 %v817
    %837 = vmatpush.bf16.msra.mxu0 %v816
    %838 = vmatpush.bf16.msra.mxu0 %v815
    %839 = vmatmul.bf16.gmra.mxu0 %v762
    %v840 = vpop.f32.mrf.mxu0
    %v841 = vadd.f32 %v781, %v840
    %v842 = vpop.f32.mrf.mxu0
    %843 = vdwg.mxu0
    %v844 = vpack.c.bf16 %v841, %v841
    %845 = vst [vmem:[%s7] sm:$0xf] %v844
    // Predicated region
    $region34: #{rainbow_dqn_forward.1} parent=1 // pred_check
      _
    $region35: #{rainbow_dqn_forward.1} parent=1 // pred_check_branch
      %847 = sbr.rel (0) target = $region37
    $region36: #{rainbow_dqn_forward.1} parent=1 // pred_region
      _
    $region37: #{rainbow_dqn_forward.1} parent=1 // pred_fallthru
      _
    // Predicated region
    $region38: #{rainbow_dqn_forward.1} parent=1 // pred_check
      _
    $region39: #{rainbow_dqn_forward.1} parent=1 // pred_check_branch
      %849 = sbr.rel (0) target = $region41
    $region40: #{rainbow_dqn_forward.1} parent=1 // pred_region
      _
    $region41: #{rainbow_dqn_forward.1} parent=1 // pred_fallthru
      _
    %850 = vsyncpa [#allocation3], 1

</llo_original>
